<compile_context>
chip_gen: v7x
topology: tpu7x:2x2x1
jax: 0.10.0
libtpu: 0.0.40
codegen_flags: <defaults>
</compile_context>

<pallas_src>
import functools

import jax
import jax.numpy as jnp
from jax.experimental import pallas as pl
from jax.experimental.pallas import tpu as pltpu


def _dgm_kernel(x_ref, sp_ref, sf_ref,
                u_ref, b_ref, wzr_ref, wg_ref, wh_ref,
                out_ref, *, hidden):
    f32 = jnp.float32
    H = hidden
    cd = u_ref.dtype                       # matmul (MXU) dtype

    # Activations arrive in their original dtype (f32); cast only the matmul
    # operands.  The cast is a VPU op hidden under MXU slack.
    x_f32 = x_ref[...].astype(f32)         # (tb, in_dim)
    sp_f32 = sp_ref[...].astype(f32)       # (tb, H) -- stays f32 for elementwise
    sf_f32 = sf_ref[...].astype(f32)       # (tb, H)

    x_c = x_f32.astype(cd)
    sp_c = sp_f32.astype(cd)
    sf_c = sf_f32.astype(cd)

    # --- independent matmuls first (fused wide-N, f32 accumulation) ---------
    xu = jnp.dot(x_c, u_ref[...], preferred_element_type=f32) + b_ref[...]   # (tb, 4H)
    szr = jnp.dot(sp_c, wzr_ref[...], preferred_element_type=f32)            # (tb, 2H)
    sg = jnp.dot(sf_c, wg_ref[...], preferred_element_type=f32)              # (tb, H)

    xu_z = xu[:, 0 * H:1 * H]
    xu_g = xu[:, 1 * H:2 * H]
    xu_r = xu[:, 2 * H:3 * H]
    xu_h = xu[:, 3 * H:4 * H]
    s_z = szr[:, :H]
    s_r = szr[:, H:]

    # --- dependent path: r, then the only dependent matmul (W_h) ------------
    r = jnp.tanh(xu_r + s_r)                                    # f32 (EUP)
    sr = (sp_f32 * r).astype(cd)                                # f32 product, cast only for MXU
    sh = jnp.dot(sr, wh_ref[...], preferred_element_type=f32)   # (tb, H)

    # --- epilogue: remaining tanh + blend (f32 on VPU/EUP) ------------------
    z = jnp.tanh(xu_z + s_z)
    g = jnp.tanh(xu_g + sg)
    h = jnp.tanh(xu_h + sh)

    out_ref[...] = ((1.0 - g) * h + z * sp_f32).astype(out_ref.dtype)


def _pick_tb(B):
    """Largest MXU-friendly batch tile <= 256 dividing B, preferring >= 2 grid steps."""
    candidates = [t for t in (256, 128, 64, 32, 16, 8) if t <= B and B % t == 0]
    if not candidates:
        return B
    for t in candidates:                   # candidates are descending
        if B // t >= 2:
            return t
    return candidates[-1]


def _vmem_capacity_bytes():
    try:
        cap = getattr(pltpu.get_tpu_info(), "vmem_capacity_bytes", None)
        if cap:
            return int(cap)
    except Exception:
        pass
    return 64 << 20                        # conservative fallback (v7x per-TC)


def prepare_dgm_params(params, compute_dtype=jnp.bfloat16):
    """Cast weights to the matmul dtype ONCE (amortized across time steps)."""
    out = dict(params)
    for k in ("U_all", "W_zr", "W_g", "W_h"):
        out[k] = params[k].astype(compute_dtype)
    out["b_all"] = params["b_all"].astype(jnp.float32)   # added to f32 accumulator
    return out


def dgm_block(x, s_prev, s_first, params, *, tb=None,
              compute_dtype=jnp.bfloat16, out_dtype=None):
    """DGMBlock forward: s_next = (1-g)*h + z*s_prev.

    x:        (B, in_dim)      s_prev, s_first: (B, hidden)
    params:   fused, pre-transposed (in, out) weights:
              U_all (in_dim, 4H) [order z,g,r,h], b_all (1, 4H),
              W_zr (H, 2H) [order z,r], W_g (H, H), W_h (H, H).
              Pass params through prepare_dgm_params() to avoid per-call casts.
    """
    B, in_dim = x.shape
    H = s_prev.shape[1]
    assert H % 128 == 0, "hidden_dim must be a multiple of 128 (lane-dense slices/stores)"
    # in_dim is the contraction dim of the U matmul; multiples of 8 keep loads aligned.
    if out_dtype is None:
        out_dtype = x.dtype
    if tb is None:
        tb = _pick_tb(B)
    assert B % tb == 0, "batch must be a multiple of the batch tile"

    cd = compute_dtype
    # No-op if params were prepared with prepare_dgm_params(compute_dtype).
    u_all = params["U_all"].astype(cd)
    w_zr = params["W_zr"].astype(cd)
    w_g = params["W_g"].astype(cd)
    w_h = params["W_h"].astype(cd)
    b_all = params["b_all"].astype(jnp.float32)

    # --- VMEM budget: single-buffered weights + double-buffered act tiles ---
    wsz = jnp.dtype(cd).itemsize
    in_sz = jnp.dtype(x.dtype).itemsize
    out_sz = jnp.dtype(out_dtype).itemsize
    weight_bytes = (in_dim * 4 * H + 2 * H * H + 2 * H * H) * wsz + 4 * H * 4
    act_bytes = (tb * in_dim + 2 * tb * H) * in_sz + tb * H * out_sz
    interm_bytes = tb * 16 * H * 4                       # xu/szr/sg + gate temps (f32)
    need = weight_bytes + 2 * act_bytes + interm_bytes + (8 << 20)
    cap = _vmem_capacity_bytes()
    vmem_limit = int(min(max(need, 32 << 20), cap - (16 << 20)))

    const_idx = lambda i: (0, 0)
    batch_x = pl.BlockSpec((tb, in_dim), lambda i: (i, 0))
    batch_s = pl.BlockSpec((tb, H), lambda i: (i, 0))
    # Constant-index weights: single-buffer (double-buffering buys nothing).
    u_spec = pl.BlockSpec((in_dim, 4 * H), const_idx, pipeline_mode=pl.Buffered(1))
    b_spec = pl.BlockSpec((1, 4 * H), const_idx, pipeline_mode=pl.Buffered(1))
    wzr_spec = pl.BlockSpec((H, 2 * H), const_idx, pipeline_mode=pl.Buffered(1))
    wg_spec = pl.BlockSpec((H, H), const_idx, pipeline_mode=pl.Buffered(1))
    wh_spec = pl.BlockSpec((H, H), const_idx, pipeline_mode=pl.Buffered(1))

    cost = pl.CostEstimate(
        flops=2 * B * (4 * in_dim * H + 4 * H * H),
        transcendentals=4 * B * H,
        bytes_accessed=int(B * in_dim * in_sz + 2 * B * H * in_sz + B * H * out_sz
                           + weight_bytes),
    )

    out = pl.pallas_call(
        functools.partial(_dgm_kernel, hidden=H),
        out_shape=jax.ShapeDtypeStruct((B, H), out_dtype),
        grid_spec=pltpu.PrefetchScalarGridSpec(
            num_scalar_prefetch=0,
            grid=(B // tb,),
            in_specs=[batch_x, batch_s, batch_s,
                      u_spec, b_spec, wzr_spec, wg_spec, wh_spec],
            out_specs=batch_s,
        ),
        compiler_params=pltpu.CompilerParams(
            dimension_semantics=("parallel",),
            vmem_limit_bytes=vmem_limit),
        cost_estimate=cost,
    )(x, s_prev, s_first, u_all, b_all, w_zr, w_g, w_h)
    return out


def _xavier_uniform(key, fan_out, fan_in):
    # matches torch.nn.init.xavier_uniform_ on a (out, in) Linear weight
    bound = (6.0 / (fan_in + fan_out)) ** 0.5
    return jax.random.uniform(key, (fan_out, fan_in), jnp.float32, -bound, bound)


def init_dgm_params(key, in_dim, hidden):
    """PyTorch-equivalent init, stored fused & pre-transposed to (in, out)."""
    keys = jax.random.split(key, 8)
    gates = ["z", "g", "r", "h"]
    U, W, b = {}, {}, {}
    for i, n in enumerate(gates):
        U[n] = _xavier_uniform(keys[2 * i], hidden, in_dim).T        # (in_dim, H)
        W[n] = _xavier_uniform(keys[2 * i + 1], hidden, hidden).T    # (H, H)
        b[n] = jnp.zeros((hidden,), jnp.float32)
    return {
        "U_all": jnp.concatenate([U["z"], U["g"], U["r"], U["h"]], axis=1),   # (in_dim, 4H)
        "b_all": jnp.concatenate([b["z"], b["g"], b["r"], b["h"]])[None, :],  # (1, 4H)
        "W_zr": jnp.concatenate([W["z"], W["r"]], axis=1),                    # (H, 2H)
        "W_g": W["g"],                                                        # (H, H)
        "W_h": W["h"],                                                        # (H, H)
    }


def dgm_block_ref(x, s_prev, s_first, p):
    """Pure-JAX reference, identical math to the PyTorch forward."""
    H = s_prev.shape[1]
    xu = x @ p["U_all"] + p["b_all"]
    szr = s_prev @ p["W_zr"]
    sg = s_first @ p["W_g"]
    z = jnp.tanh(xu[:, 0 * H:1 * H] + szr[:, :H])
    g = jnp.tanh(xu[:, 1 * H:2 * H] + sg)
    r = jnp.tanh(xu[:, 2 * H:3 * H] + szr[:, H:])
    h = jnp.tanh(xu[:, 3 * H:4 * H] + (s_prev * r) @ p["W_h"])
    return (1.0 - g) * h + z * s_prev


if __name__ == "__main__":
    B, in_dim, hidden = 16, 16, 128   # small, lane-aligned hidden dim

    key = jax.random.PRNGKey(0)
    k_x, k_sp, k_sf, k_p = jax.random.split(key, 4)
    x = jax.random.normal(k_x, (B, in_dim), jnp.float32)
    s_prev = jax.random.normal(k_sp, (B, hidden), jnp.float32)
    s_first = jax.random.normal(k_sf, (B, hidden), jnp.float32)
    params = init_dgm_params(k_p, in_dim, hidden)

    ref = dgm_block_ref(x, s_prev, s_first, params)

    # 1) f32 matmul path: exact check against the reference (2 grid steps).
    out_f32 = jax.block_until_ready(
        dgm_block(x, s_prev, s_first, params, compute_dtype=jnp.float32))
    assert out_f32.shape == (B, hidden)
    assert jnp.allclose(out_f32, ref, atol=1e-5, rtol=1e-5), "f32 path mismatch"

    # 2) bf16 matmul path (default) with weights pre-cast once (amortized).
    bf16_params = prepare_dgm_params(params, jnp.bfloat16)
    out_bf16 = jax.block_until_ready(dgm_block(x, s_prev, s_first, bf16_params))
    assert out_bf16.shape == (B, hidden)
    assert jnp.allclose(out_bf16, ref, atol=5e-2, rtol=5e-2), "bf16 path mismatch"

    print("KERNEL_OK")
</pallas_src>

<mosaic_0001>
module attributes {stable_mosaic.version = 11 : i64} {
  func.func @_dgm_kernel(%arg0: i32, %arg1: memref<8x16xf32, #tpu.memory_space<vmem>>, %arg2: memref<8x128xf32, #tpu.memory_space<vmem>>, %arg3: memref<8x128xf32, #tpu.memory_space<vmem>>, %arg4: memref<16x512xf32, #tpu.memory_space<vmem>>, %arg5: memref<1x512xf32, #tpu.memory_space<vmem>>, %arg6: memref<128x256xf32, #tpu.memory_space<vmem>>, %arg7: memref<128x128xf32, #tpu.memory_space<vmem>>, %arg8: memref<128x128xf32, #tpu.memory_space<vmem>>, %arg9: memref<8x128xf32, #tpu.memory_space<vmem>>) attributes {dimension_semantics = [#tpu.dimension_semantics<parallel>], iteration_bounds = array<i64: 2>, scalar_prefetch = 0 : i64, scratch_operands = 0 : i64, tpu.core_type = #tpu.core_type<tc>, window_params = [{transform_indices = @transform_0, window_bounds = array<i64: 8, 16>}, {transform_indices = @transform_1, window_bounds = array<i64: 8, 128>}, {transform_indices = @transform_2, window_bounds = array<i64: 8, 128>}, {pipeline_mode = #tpu.pipeline_mode<synchronous>, transform_indices = @transform_3, window_bounds = array<i64: 16, 512>}, {pipeline_mode = #tpu.pipeline_mode<synchronous>, transform_indices = @transform_4, window_bounds = array<i64: 1, 512>}, {pipeline_mode = #tpu.pipeline_mode<synchronous>, transform_indices = @transform_5, window_bounds = array<i64: 128, 256>}, {pipeline_mode = #tpu.pipeline_mode<synchronous>, transform_indices = @transform_6, window_bounds = array<i64: 128, 128>}, {pipeline_mode = #tpu.pipeline_mode<synchronous>, transform_indices = @transform_7, window_bounds = array<i64: 128, 128>}, {transform_indices = @transform_8, window_bounds = array<i64: 8, 128>}]} {
    %c0 = arith.constant 0 : index
    %c0_0 = arith.constant 0 : index
    %0 = vector.load %arg1[%c0, %c0_0] : memref<8x16xf32, #tpu.memory_space<vmem>>, vector<8x16xf32>
    %c0_1 = arith.constant 0 : index
    %c0_2 = arith.constant 0 : index
    %1 = vector.load %arg2[%c0_1, %c0_2] : memref<8x128xf32, #tpu.memory_space<vmem>>, vector<8x128xf32>
    %c0_3 = arith.constant 0 : index
    %c0_4 = arith.constant 0 : index
    %2 = vector.load %arg3[%c0_3, %c0_4] : memref<8x128xf32, #tpu.memory_space<vmem>>, vector<8x128xf32>
    %c0_5 = arith.constant 0 : index
    %c0_6 = arith.constant 0 : index
    %3 = vector.load %arg4[%c0_5, %c0_6] : memref<16x512xf32, #tpu.memory_space<vmem>>, vector<16x512xf32>
    %cst = arith.constant dense<0.000000e+00> : vector<8x512xf32>
    %4 = tpu.matmul %0, %3, %cst {dimension_numbers = #tpu.dot_dimension_numbers<[1], [0], [0], [1], [0, 0, 1, 1], [], []>} : vector<8x16xf32>, vector<16x512xf32>, vector<8x512xf32> -> vector<8x512xf32>
    %c0_7 = arith.constant 0 : index
    %c0_8 = arith.constant 0 : index
    %5 = vector.load %arg5[%c0_7, %c0_8] : memref<1x512xf32, #tpu.memory_space<vmem>>, vector<1x512xf32>
    %6 = vector.broadcast %5 : vector<1x512xf32> to vector<8x512xf32>
    %7 = arith.addf %4, %6 : vector<8x512xf32>
    %c0_9 = arith.constant 0 : index
    %c0_10 = arith.constant 0 : index
    %8 = vector.load %arg6[%c0_9, %c0_10] : memref<128x256xf32, #tpu.memory_space<vmem>>, vector<128x256xf32>
    %cst_11 = arith.constant dense<0.000000e+00> : vector<8x256xf32>
    %9 = tpu.matmul %1, %8, %cst_11 {dimension_numbers = #tpu.dot_dimension_numbers<[1], [0], [0], [1], [0, 0, 1, 1], [], []>} : vector<8x128xf32>, vector<128x256xf32>, vector<8x256xf32> -> vector<8x256xf32>
    %c0_12 = arith.constant 0 : index
    %c0_13 = arith.constant 0 : index
    %10 = vector.load %arg7[%c0_12, %c0_13] : memref<128x128xf32, #tpu.memory_space<vmem>>, vector<128x128xf32>
    %cst_14 = arith.constant dense<0.000000e+00> : vector<8x128xf32>
    %11 = tpu.matmul %2, %10, %cst_14 {dimension_numbers = #tpu.dot_dimension_numbers<[1], [0], [0], [1], [0, 0, 1, 1], [], []>} : vector<8x128xf32>, vector<128x128xf32>, vector<8x128xf32> -> vector<8x128xf32>
    %12 = vector.extract_strided_slice %7 {offsets = [0, 0], sizes = [8, 128], strides = [1, 1]} : vector<8x512xf32> to vector<8x128xf32>
    %13 = vector.extract_strided_slice %7 {offsets = [0, 128], sizes = [8, 128], strides = [1, 1]} : vector<8x512xf32> to vector<8x128xf32>
    %14 = vector.extract_strided_slice %7 {offsets = [0, 256], sizes = [8, 128], strides = [1, 1]} : vector<8x512xf32> to vector<8x128xf32>
    %15 = vector.extract_strided_slice %7 {offsets = [0, 384], sizes = [8, 128], strides = [1, 1]} : vector<8x512xf32> to vector<8x128xf32>
    %16 = vector.extract_strided_slice %9 {offsets = [0, 0], sizes = [8, 128], strides = [1, 1]} : vector<8x256xf32> to vector<8x128xf32>
    %17 = vector.extract_strided_slice %9 {offsets = [0, 128], sizes = [8, 128], strides = [1, 1]} : vector<8x256xf32> to vector<8x128xf32>
    %18 = arith.addf %14, %17 : vector<8x128xf32>
    %19 = math.tanh %18 : vector<8x128xf32>
    %20 = arith.mulf %1, %19 : vector<8x128xf32>
    %c0_15 = arith.constant 0 : index
    %c0_16 = arith.constant 0 : index
    %21 = vector.load %arg8[%c0_15, %c0_16] : memref<128x128xf32, #tpu.memory_space<vmem>>, vector<128x128xf32>
    %cst_17 = arith.constant dense<0.000000e+00> : vector<8x128xf32>
    %22 = tpu.matmul %20, %21, %cst_17 {dimension_numbers = #tpu.dot_dimension_numbers<[1], [0], [0], [1], [0, 0, 1, 1], [], []>} : vector<8x128xf32>, vector<128x128xf32>, vector<8x128xf32> -> vector<8x128xf32>
    %23 = arith.addf %12, %16 : vector<8x128xf32>
    %24 = math.tanh %23 : vector<8x128xf32>
    %25 = arith.addf %13, %11 : vector<8x128xf32>
    %26 = math.tanh %25 : vector<8x128xf32>
    %27 = arith.addf %15, %22 : vector<8x128xf32>
    %28 = math.tanh %27 : vector<8x128xf32>
    %cst_18 = arith.constant 1.000000e+00 : f32
    %29 = vector.broadcast %cst_18 : f32 to vector<8x128xf32>
    %30 = arith.subf %29, %26 : vector<8x128xf32>
    %31 = arith.mulf %30, %28 : vector<8x128xf32>
    %32 = arith.mulf %24, %1 : vector<8x128xf32>
    %33 = arith.addf %31, %32 : vector<8x128xf32>
    %c0_19 = arith.constant 0 : index
    %c0_20 = arith.constant 0 : index
    %34 = vector.load %arg9[%c0_19, %c0_20] : memref<8x128xf32, #tpu.memory_space<vmem>>, vector<8x128xf32>
    tpu.vector_store %arg9[%c0_19, %c0_20], %33 {strides = array<i32>} : memref<8x128xf32, #tpu.memory_space<vmem>>, vector<8x128xf32>,
    return
  }
  func.func @transform_0(%arg0: i32) -> (i32, i32) {
    %c0_i32 = arith.constant 0 : i32
    %c0_i32_0 = arith.constant 0 : i32
    return %arg0, %c0_i32 : i32, i32
  }
  func.func @transform_1(%arg0: i32) -> (i32, i32) {
    %c0_i32 = arith.constant 0 : i32
    %c0_i32_0 = arith.constant 0 : i32
    return %arg0, %c0_i32 : i32, i32
  }
  func.func @transform_2(%arg0: i32) -> (i32, i32) {
    %c0_i32 = arith.constant 0 : i32
    %c0_i32_0 = arith.constant 0 : i32
    return %arg0, %c0_i32 : i32, i32
  }
  func.func @transform_3(%arg0: i32) -> (i32, i32) {
    %c0_i32 = arith.constant 0 : i32
    %c0_i32_0 = arith.constant 0 : i32
    %c0_i32_1 = arith.constant 0 : i32
    return %c0_i32, %c0_i32_0 : i32, i32
  }
  func.func @transform_4(%arg0: i32) -> (i32, i32) {
    %c0_i32 = arith.constant 0 : i32
    %c0_i32_0 = arith.constant 0 : i32
    %c0_i32_1 = arith.constant 0 : i32
    return %c0_i32, %c0_i32_0 : i32, i32
  }
  func.func @transform_5(%arg0: i32) -> (i32, i32) {
    %c0_i32 = arith.constant 0 : i32
    %c0_i32_0 = arith.constant 0 : i32
    %c0_i32_1 = arith.constant 0 : i32
    return %c0_i32, %c0_i32_0 : i32, i32
  }
  func.func @transform_6(%arg0: i32) -> (i32, i32) {
    %c0_i32 = arith.constant 0 : i32
    %c0_i32_0 = arith.constant 0 : i32
    %c0_i32_1 = arith.constant 0 : i32
    return %c0_i32, %c0_i32_0 : i32, i32
  }
  func.func @transform_7(%arg0: i32) -> (i32, i32) {
    %c0_i32 = arith.constant 0 : i32
    %c0_i32_0 = arith.constant 0 : i32
    %c0_i32_1 = arith.constant 0 : i32
    return %c0_i32, %c0_i32_0 : i32, i32
  }
  func.func @transform_8(%arg0: i32) -> (i32, i32) {
    %c0_i32 = arith.constant 0 : i32
    %c0_i32_0 = arith.constant 0 : i32
    return %arg0, %c0_i32 : i32, i32
  }
}

</mosaic_0001>

<llo_original>
// kernel: tpu_custom_call.1
$region0: #{tpu_custom_call.1}
  #allocation0 [shape = 'u32[]', space=smem, size = 0x4, offset = 0x4, fixed_abs, tag = 'smem constant byte address 0x4 - core index']
  #allocation1 [shape = 'u32[144,128]{1,0:T(1,128)}', space=vmem, size = 0x12000, scoped, tag = 'internal scratch']
  %s0 = inlined_call_operand.hbm [shape: f32[16,16], index: 0, kind: input, shape index: {}]
  %s1 = inlined_call_operand.hbm [shape: f32[16,128], index: 1, kind: input, shape index: {}]
  %s2 = inlined_call_operand.hbm [shape: f32[16,128], index: 2, kind: input, shape index: {}]
  %s3 = inlined_call_operand.hbm [shape: f32[16,512], index: 3, kind: input, shape index: {}]
  %s4 = inlined_call_operand.vmem [shape: f32[1,512], index: 4, kind: input, shape index: {}]
  %s5 = inlined_call_operand.hbm [shape: f32[128,256], index: 5, kind: input, shape index: {}]
  %s6 = inlined_call_operand.hbm [shape: f32[128,128], index: 6, kind: input, shape index: {}]
  %s7 = inlined_call_operand.hbm [shape: f32[128,128], index: 7, kind: input, shape index: {}]
  %s8 = inlined_call_operand.hbm [shape: f32[16,128], index: 8, kind: output, shape index: {}]
  %s9 = sld [smem:[#allocation0]]
  $region93: #{tpu_custom_call.1} parent=0
    _
  %s11 = ssub.s32 1, %s9
  %s12 = scalar_select 0, %s11, %s9
  $region1: #{tpu_custom_call.1} parent=0
    #allocation2 [shape = 'u8[8192]{0}', space=vmem, size = 0x2000, scoped, tag = 'input window, operand 0']
    #allocation3 [shape = 's32[2]{0}', space=sflag, size = 0x8, scoped, tag = 'scoped memory for tpu_custom_call.1']
    #allocation4 [shape = 's32[2]{0}', space=sflag, size = 0x8, scoped, tag = 'scoped memory for tpu_custom_call.1']
    #allocation5 [shape = 'u8[8192]{0}', space=vmem, size = 0x2000, scoped, tag = 'input window, operand 1']
    #allocation6 [shape = 's32[2]{0}', space=sflag, size = 0x8, scoped, tag = 'scoped memory for tpu_custom_call.1']
    #allocation7 [shape = 'u8[8192]{0}', space=vmem, size = 0x2000, scoped, tag = 'input window, operand 2']
    #allocation8 [shape = 'u8[32768]{0}', space=vmem, size = 0x8000, scoped, tag = 'input window, operand 3, single buffered']
    #allocation9 [shape = 's32[1]{0}', space=sflag, size = 0x4, scoped, tag = 'scoped memory for tpu_custom_call.1']
    #allocation10 [shape = 'u8[131072]{0}', space=vmem, size = 0x20000, scoped, tag = 'input window, operand 5, single buffered']
    #allocation11 [shape = 'u8[65536]{0}', space=vmem, size = 0x10000, scoped, tag = 'input window, operand 6, single buffered']
    #allocation12 [shape = 's32[1]{0}', space=sflag, size = 0x4, scoped, tag = 'scoped memory for tpu_custom_call.1']
    #allocation13 [shape = 'u8[65536]{0}', space=vmem, size = 0x10000, scoped, tag = 'input window, operand 7, single buffered']
    #allocation14 [shape = 'u8[8192]{0}', space=vmem, size = 0x2000, scoped, tag = 'output window, operand 0']
    %13 = vsyncpa [#allocation3], 0
    %s14 = scalar_lea.sflag [#allocation3], 1
    %15 = vsyncpa %s14, 0
    %16 = vsyncpa [#allocation6], 0
    %s17 = scalar_lea.sflag [#allocation6], 1
    %18 = vsyncpa %s17, 0
    %19 = vsyncpa [#allocation9], 0
    %20 = vsyncpa [#allocation12], 0
    %21 = vsyncpa [#allocation4], 0
    %s22 = scalar_lea.sflag [#allocation4], 1
    %23 = vsyncpa %s22, 0
    loop: start=0, step=1, limit=4
    $region2: #{tpu_custom_call.1} parent=1 // loop_pre_header
      _
    $region3: #{tpu_custom_call.1} parent=1 // loop_header
      %s25 = sphi 0, %s29
      %p26 = scmp.ge.s32.totalorder %s25, 4
      %s35 = sphi 0, %s37
      %s38 = sphi 0, %s35
      %s39 = sphi 0, %s38
      %s55 = sphi 0, %s39
      %s61 = sphi 0, %s63
      %s64 = sphi 0, %s61
      %s65 = sphi 0, %s64
      %s81 = sphi 0, %s65
      %s87 = sphi 0, %s89
      %s90 = sphi 0, %s87
      %s91 = sphi 0, %s90
      %s107 = sphi 0, %s91
      %s111 = sphi 0, %s111
      %s113 = sphi 0, %s111
      %s114 = sphi 0, %s113
      %s128 = sphi 0, %s114
      %s132 = sphi 0, %s132
      %s134 = sphi 0, %s132
      %s135 = sphi 0, %s134
      %s149 = sphi 0, %s135
      %s153 = sphi 0, %s153
      %s155 = sphi 0, %s153
      %s156 = sphi 0, %s155
      %s170 = sphi 0, %s156
      %s174 = sphi 0, %s174
      %s176 = sphi 0, %s174
      %s177 = sphi 0, %s176
      %s191 = sphi 0, %s177
      %s195 = sphi 0, %s195
      %s197 = sphi 0, %s195
      %s198 = sphi 0, %s197
      %s212 = sphi 0, %s198
      %s218 = sphi 0, %s220
      %s221 = sphi 0, %s218
      %s222 = sphi 0, %s221
      %s238 = sphi 0, %s222
    $region4: #{tpu_custom_call.1} parent=1 // loop_header_branch
      %28 = sbr.rel (%p26) target = $region8
    $region5: #{tpu_custom_call.1} parent=1 // loop_body
      %s30 = ssub.s32 %s25, 1
      %s31 = ssub.s32 %s25, 2
      %s32 = sadd.s32 %s25, 1
      %s33 = ssub.s32 %s25, %s32
      %p34 = scmp.eq.s32.totalorder %s33, 0
      %s36 = sadd.s32 %s35, 1
      %s37 = scalar_select %p34, %s35, %s36
      %p40 = pneg %p34
      %p41 = scmp.eq.s32.totalorder %s25, 1
      %p42 = por %p40, %p41
      %p43 = scmp.ne.s32.totalorder %s35, %s38
      %p44 = scmp.eq.s32.totalorder %s25, 0
      %p45 = por %p43, %p44
      %p46 = scmp.ne.s32.totalorder %s35, %s38
      %p47 = scmp.eq.s32.totalorder %s30, 1
      %p48 = por %p46, %p47
      %p49 = scmp.ne.s32.totalorder %s38, %s39
      %p50 = scmp.eq.s32.totalorder %s30, 0
      %p51 = por %p49, %p50
      %p52 = scmp.ne.s32.totalorder %s38, %s39
      %p53 = scmp.eq.s32.totalorder %s31, 1
      %p54 = por %p52, %p53
      %p56 = scmp.ne.s32.totalorder %s39, %s55
      %p57 = scmp.eq.s32.totalorder %s31, 0
      %p58 = por %p56, %p57
      %s59 = ssub.s32 %s25, %s32
      %p60 = scmp.eq.s32.totalorder %s59, 0
      %s62 = sadd.s32 %s61, 1
      %s63 = scalar_select %p60, %s61, %s62
      %p66 = pneg %p60
      %p67 = scmp.eq.s32.totalorder %s25, 1
      %p68 = por %p66, %p67
      %p69 = scmp.ne.s32.totalorder %s61, %s64
      %p70 = scmp.eq.s32.totalorder %s25, 0
      %p71 = por %p69, %p70
      %p72 = scmp.ne.s32.totalorder %s61, %s64
      %p73 = scmp.eq.s32.totalorder %s30, 1
      %p74 = por %p72, %p73
      %p75 = scmp.ne.s32.totalorder %s64, %s65
      %p76 = scmp.eq.s32.totalorder %s30, 0
      %p77 = por %p75, %p76
      %p78 = scmp.ne.s32.totalorder %s64, %s65
      %p79 = scmp.eq.s32.totalorder %s31, 1
      %p80 = por %p78, %p79
      %p82 = scmp.ne.s32.totalorder %s65, %s81
      %p83 = scmp.eq.s32.totalorder %s31, 0
      %p84 = por %p82, %p83
      %s85 = ssub.s32 %s25, %s32
      %p86 = scmp.eq.s32.totalorder %s85, 0
      %s88 = sadd.s32 %s87, 1
      %s89 = scalar_select %p86, %s87, %s88
      %p92 = pneg %p86
      %p93 = scmp.eq.s32.totalorder %s25, 1
      %p94 = por %p92, %p93
      %p95 = scmp.ne.s32.totalorder %s87, %s90
      %p96 = scmp.eq.s32.totalorder %s25, 0
      %p97 = por %p95, %p96
      %p98 = scmp.ne.s32.totalorder %s87, %s90
      %p99 = scmp.eq.s32.totalorder %s30, 1
      %p100 = por %p98, %p99
      %p101 = scmp.ne.s32.totalorder %s90, %s91
      %p102 = scmp.eq.s32.totalorder %s30, 0
      %p103 = por %p101, %p102
      %p104 = scmp.ne.s32.totalorder %s90, %s91
      %p105 = scmp.eq.s32.totalorder %s31, 1
      %p106 = por %p104, %p105
      %p108 = scmp.ne.s32.totalorder %s91, %s107
      %p109 = scmp.eq.s32.totalorder %s31, 0
      %p110 = por %p108, %p109
      %s112 = sadd.s32 %s111, 1
      %p115 = scmp.eq.s32.totalorder %s25, 1
      %p116 = scmp.ne.s32.totalorder %s111, %s113
      %p117 = scmp.eq.s32.totalorder %s25, 0
      %p118 = por %p116, %p117
      %p119 = scmp.ne.s32.totalorder %s111, %s113
      %p120 = scmp.eq.s32.totalorder %s30, 1
      %p121 = por %p119, %p120
      %p122 = scmp.ne.s32.totalorder %s113, %s114
      %p123 = scmp.eq.s32.totalorder %s30, 0
      %p124 = por %p122, %p123
      %p125 = scmp.ne.s32.totalorder %s113, %s114
      %p126 = scmp.eq.s32.totalorder %s31, 1
      %p127 = por %p125, %p126
      %p129 = scmp.ne.s32.totalorder %s114, %s128
      %p130 = scmp.eq.s32.totalorder %s31, 0
      %p131 = por %p129, %p130
      %s133 = sadd.s32 %s132, 1
      %p136 = scmp.eq.s32.totalorder %s25, 1
      %p137 = scmp.ne.s32.totalorder %s132, %s134
      %p138 = scmp.eq.s32.totalorder %s25, 0
      %p139 = por %p137, %p138
      %p140 = scmp.ne.s32.totalorder %s132, %s134
      %p141 = scmp.eq.s32.totalorder %s30, 1
      %p142 = por %p140, %p141
      %p143 = scmp.ne.s32.totalorder %s134, %s135
      %p144 = scmp.eq.s32.totalorder %s30, 0
      %p145 = por %p143, %p144
      %p146 = scmp.ne.s32.totalorder %s134, %s135
      %p147 = scmp.eq.s32.totalorder %s31, 1
      %p148 = por %p146, %p147
      %p150 = scmp.ne.s32.totalorder %s135, %s149
      %p151 = scmp.eq.s32.totalorder %s31, 0
      %p152 = por %p150, %p151
      %s154 = sadd.s32 %s153, 1
      %p157 = scmp.eq.s32.totalorder %s25, 1
      %p158 = scmp.ne.s32.totalorder %s153, %s155
      %p159 = scmp.eq.s32.totalorder %s25, 0
      %p160 = por %p158, %p159
      %p161 = scmp.ne.s32.totalorder %s153, %s155
      %p162 = scmp.eq.s32.totalorder %s30, 1
      %p163 = por %p161, %p162
      %p164 = scmp.ne.s32.totalorder %s155, %s156
      %p165 = scmp.eq.s32.totalorder %s30, 0
      %p166 = por %p164, %p165
      %p167 = scmp.ne.s32.totalorder %s155, %s156
      %p168 = scmp.eq.s32.totalorder %s31, 1
      %p169 = por %p167, %p168
      %p171 = scmp.ne.s32.totalorder %s156, %s170
      %p172 = scmp.eq.s32.totalorder %s31, 0
      %p173 = por %p171, %p172
      %s175 = sadd.s32 %s174, 1
      %p178 = scmp.eq.s32.totalorder %s25, 1
      %p179 = scmp.ne.s32.totalorder %s174, %s176
      %p180 = scmp.eq.s32.totalorder %s25, 0
      %p181 = por %p179, %p180
      %p182 = scmp.ne.s32.totalorder %s174, %s176
      %p183 = scmp.eq.s32.totalorder %s30, 1
      %p184 = por %p182, %p183
      %p185 = scmp.ne.s32.totalorder %s176, %s177
      %p186 = scmp.eq.s32.totalorder %s30, 0
      %p187 = por %p185, %p186
      %p188 = scmp.ne.s32.totalorder %s176, %s177
      %p189 = scmp.eq.s32.totalorder %s31, 1
      %p190 = por %p188, %p189
      %p192 = scmp.ne.s32.totalorder %s177, %s191
      %p193 = scmp.eq.s32.totalorder %s31, 0
      %p194 = por %p192, %p193
      %s196 = sadd.s32 %s195, 1
      %p199 = scmp.eq.s32.totalorder %s25, 1
      %p200 = scmp.ne.s32.totalorder %s195, %s197
      %p201 = scmp.eq.s32.totalorder %s25, 0
      %p202 = por %p200, %p201
      %p203 = scmp.ne.s32.totalorder %s195, %s197
      %p204 = scmp.eq.s32.totalorder %s30, 1
      %p205 = por %p203, %p204
      %p206 = scmp.ne.s32.totalorder %s197, %s198
      %p207 = scmp.eq.s32.totalorder %s30, 0
      %p208 = por %p206, %p207
      %p209 = scmp.ne.s32.totalorder %s197, %s198
      %p210 = scmp.eq.s32.totalorder %s31, 1
      %p211 = por %p209, %p210
      %p213 = scmp.ne.s32.totalorder %s198, %s212
      %p214 = scmp.eq.s32.totalorder %s31, 0
      %p215 = por %p213, %p214
      %s216 = ssub.s32 %s25, %s32
      %p217 = scmp.eq.s32.totalorder %s216, 0
      %s219 = sadd.s32 %s218, 1
      %s220 = scalar_select %p217, %s218, %s219
      %p223 = pneg %p217
      %p224 = scmp.eq.s32.totalorder %s25, 1
      %p225 = por %p223, %p224
      %p226 = scmp.ne.s32.totalorder %s218, %s221
      %p227 = scmp.eq.s32.totalorder %s25, 0
      %p228 = por %p226, %p227
      %p229 = scmp.ne.s32.totalorder %s218, %s221
      %p230 = scmp.eq.s32.totalorder %s30, 1
      %p231 = por %p229, %p230
      %p232 = scmp.ne.s32.totalorder %s221, %s222
      %p233 = scmp.eq.s32.totalorder %s30, 0
      %p234 = por %p232, %p233
      %p235 = scmp.ne.s32.totalorder %s221, %s222
      %p236 = scmp.eq.s32.totalorder %s31, 1
      %p237 = por %p235, %p236
      %p239 = scmp.ne.s32.totalorder %s222, %s238
      %p240 = scmp.eq.s32.totalorder %s31, 0
      %p241 = por %p239, %p240
      %p242 = scmp.le.s32.totalorder 1, %s25
      %p243 = scmp.lt.s32.totalorder %s25, 3
      %p244 = pnand %p242, %p243
      %p245 = pneg %p244
      // Predicated region
      $region9: #{tpu_custom_call.1} parent=5 // pred_check
        _
      $region10: #{tpu_custom_call.1} parent=5 // pred_check_branch
        %247 = sbr.rel (%p244) target = $region12
      $region11: #{tpu_custom_call.1} parent=5 // pred_region
        %s248 = ssub.s32 %s25, 1
        // Predicated region
        $region13: #{tpu_custom_call.1} parent=11 // pred_check
          %p249 = pneg %p124
        $region14: #{tpu_custom_call.1} parent=11 // pred_check_branch
          %251 = sbr.rel (%p249) target = $region16
        $region15: #{tpu_custom_call.1} parent=11 // pred_region
          %s253 = ssub.s32 1024, 1024
          %254 = vsyncadd [#allocation9], %s253
          %s255 = sshll.u32 [#allocation8], 4
          %s256 = int_to_ptr.vmem [resolvable:$true] %s255
          %261 = dma.hbm_to_vmem [thread:$0]  %s3, 1024, %s256, [#allocation9], 512, 512, 32
        $region16: #{tpu_custom_call.1} parent=11 // pred_fallthru
          _
        // Predicated region
        $region17: #{tpu_custom_call.1} parent=11 // pred_check
          %p262 = pneg %p145
        $region18: #{tpu_custom_call.1} parent=11 // pred_check_branch
          %264 = sbr.rel (%p262) target = $region20
        $region19: #{tpu_custom_call.1} parent=11 // pred_region
          _
        $region20: #{tpu_custom_call.1} parent=11 // pred_fallthru
          _
        // Predicated region
        $region21: #{tpu_custom_call.1} parent=11 // pred_check
          %p265 = pneg %p166
        $region22: #{tpu_custom_call.1} parent=11 // pred_check_branch
          %267 = sbr.rel (%p265) target = $region24
        $region23: #{tpu_custom_call.1} parent=11 // pred_region
          %s269 = ssub.s32 4096, 4096
          %270 = vsyncadd [#allocation9], %s269
          %s271 = sshll.u32 [#allocation10], 4
          %s272 = int_to_ptr.vmem [resolvable:$true] %s271
          %277 = dma.hbm_to_vmem [thread:$0]  %s5, 4096, %s272, [#allocation9], 256, 256, 16
        $region24: #{tpu_custom_call.1} parent=11 // pred_fallthru
          _
        // Predicated region
        $region25: #{tpu_custom_call.1} parent=11 // pred_check
          %p278 = pneg %p187
        $region26: #{tpu_custom_call.1} parent=11 // pred_check_branch
          %280 = sbr.rel (%p278) target = $region28
        $region27: #{tpu_custom_call.1} parent=11 // pred_region
          %s282 = ssub.s32 2048, 2048
          %283 = vsyncadd [#allocation12], %s282
          %s284 = sshll.u32 [#allocation11], 4
          %s285 = int_to_ptr.vmem [resolvable:$true] %s284
          %290 = dma.hbm_to_vmem [thread:$0]  %s6, 2048, %s285, [#allocation12], 128, 128, 8
        $region28: #{tpu_custom_call.1} parent=11 // pred_fallthru
          _
        // Predicated region
        $region29: #{tpu_custom_call.1} parent=11 // pred_check
          %p291 = pneg %p208
        $region30: #{tpu_custom_call.1} parent=11 // pred_check_branch
          %293 = sbr.rel (%p291) target = $region32
        $region31: #{tpu_custom_call.1} parent=11 // pred_region
          %s295 = ssub.s32 2048, 2048
          %296 = vsyncadd [#allocation12], %s295
          %s297 = sshll.u32 [#allocation13], 4
          %s298 = int_to_ptr.vmem [resolvable:$true] %s297
          %303 = dma.hbm_to_vmem [thread:$0]  %s7, 2048, %s298, [#allocation12], 128, 128, 8
        $region32: #{tpu_custom_call.1} parent=11 // pred_fallthru
          _
      $region12: #{tpu_custom_call.1} parent=5 // pred_fallthru
        _
      %p304 = scmp.lt.s32.totalorder %s25, 2
      // Predicated region
      $region33: #{tpu_custom_call.1} parent=5 // pred_check
        %p305 = pneg %p304
      $region34: #{tpu_custom_call.1} parent=5 // pred_check_branch
        %307 = sbr.rel (%p305) target = $region36
      $region35: #{tpu_custom_call.1} parent=5 // pred_region
        // Predicated region
        $region37: #{tpu_custom_call.1} parent=35 // pred_check
          %p308 = pneg %p45
        $region38: #{tpu_custom_call.1} parent=35 // pred_check_branch
          %310 = sbr.rel (%p308) target = $region40
        $region39: #{tpu_custom_call.1} parent=35 // pred_region
          %s311 = sand.u32 %s35, 1
          %s312 = scalar_lea.sflag [#allocation3], %s311
          %s313 = sand.u32 %s35, 1
          %s314 = smul.addr %s313, 8
          %s315 = scalar_lea.vmem [#allocation2], %s314
          %s317 = ssub.s32 128, 128
          %318 = vsyncadd %s312, %s317
          %s319 = smul.addr %s25, 128
          %s320 = scalar_lea.hbm %s0, %s319
          %s322 = sshll.u32 %s315, 4
          %s323 = int_to_ptr.vmem [resolvable:$true] %s322
          %325 = dma.hbm_to_vmem [thread:$0]  %s320, 128, %s323, %s312
        $region40: #{tpu_custom_call.1} parent=35 // pred_fallthru
          _
        // Predicated region
        $region41: #{tpu_custom_call.1} parent=35 // pred_check
          %p326 = pneg %p71
        $region42: #{tpu_custom_call.1} parent=35 // pred_check_branch
          %328 = sbr.rel (%p326) target = $region44
        $region43: #{tpu_custom_call.1} parent=35 // pred_region
          %s329 = sand.u32 %s25, 1
          %s330 = scalar_lea.sflag [#allocation6], %s329
          %s331 = sand.u32 %s61, 1
          %s332 = smul.addr %s331, 8
          %s333 = scalar_lea.vmem [#allocation5], %s332
          %s335 = ssub.s32 128, 128
          %336 = vsyncadd %s330, %s335
          %s337 = smul.addr %s25, 128
          %s338 = scalar_lea.hbm %s1, %s337
          %s340 = sshll.u32 %s333, 4
          %s341 = int_to_ptr.vmem [resolvable:$true] %s340
          %343 = dma.hbm_to_vmem [thread:$0]  %s338, 128, %s341, %s330
        $region44: #{tpu_custom_call.1} parent=35 // pred_fallthru
          _
        // Predicated region
        $region45: #{tpu_custom_call.1} parent=35 // pred_check
          %p344 = pneg %p97
        $region46: #{tpu_custom_call.1} parent=35 // pred_check_branch
          %346 = sbr.rel (%p344) target = $region48
        $region47: #{tpu_custom_call.1} parent=35 // pred_region
          %s347 = sand.u32 %s25, 1
          %s348 = scalar_lea.sflag [#allocation6], %s347
          %s349 = sand.u32 %s87, 1
          %s350 = smul.addr %s349, 8
          %s351 = scalar_lea.vmem [#allocation7], %s350
          %s353 = ssub.s32 128, 128
          %354 = vsyncadd %s348, %s353
          %s355 = smul.addr %s25, 128
          %s356 = scalar_lea.hbm %s2, %s355
          %s358 = sshll.u32 %s351, 4
          %s359 = int_to_ptr.vmem [resolvable:$true] %s358
          %361 = dma.hbm_to_vmem [thread:$0]  %s356, 128, %s359, %s348
        $region48: #{tpu_custom_call.1} parent=35 // pred_fallthru
          _
      $region36: #{tpu_custom_call.1} parent=5 // pred_fallthru
        _
      %p362 = scmp.le.s32.totalorder 1, %s25
      %p363 = scmp.lt.s32.totalorder %s25, 3
      %p364 = pnand %p362, %p363
      %p365 = pneg %p364
      // Predicated region
      $region49: #{tpu_custom_call.1} parent=5 // pred_check
        _
      $region50: #{tpu_custom_call.1} parent=5 // pred_check_branch
        %367 = sbr.rel (%p364) target = $region52
      $region51: #{tpu_custom_call.1} parent=5 // pred_region
        %s368 = ssub.s32 %s25, 1
        %s369 = sand.u32 %s38, 1
        %s370 = scalar_lea.sflag [#allocation3], %s369
        %s371 = sand.u32 %s38, 1
        %s372 = smul.addr %s371, 8
        %s373 = scalar_lea.vmem [#allocation2], %s372
        // Predicated region
        $region53: #{tpu_custom_call.1} parent=51 // pred_check
          %p374 = pneg %p51
        $region54: #{tpu_custom_call.1} parent=51 // pred_check_branch
          %376 = sbr.rel (%p374) target = $region56
        $region55: #{tpu_custom_call.1} parent=51 // pred_region
          %377 = dma.done %s370, 128
        $region56: #{tpu_custom_call.1} parent=51 // pred_fallthru
          _
        %s378 = sand.u32 %s30, 1
        %s379 = scalar_lea.sflag [#allocation6], %s378
        %s380 = sand.u32 %s64, 1
        %s381 = smul.addr %s380, 8
        %s382 = scalar_lea.vmem [#allocation5], %s381
        // Predicated region
        $region57: #{tpu_custom_call.1} parent=51 // pred_check
          %p383 = pneg %p77
        $region58: #{tpu_custom_call.1} parent=51 // pred_check_branch
          %385 = sbr.rel (%p383) target = $region60
        $region59: #{tpu_custom_call.1} parent=51 // pred_region
          %386 = dma.done %s379, 128
        $region60: #{tpu_custom_call.1} parent=51 // pred_fallthru
          _
        %s387 = sand.u32 %s30, 1
        %s388 = scalar_lea.sflag [#allocation6], %s387
        %s389 = sand.u32 %s90, 1
        %s390 = smul.addr %s389, 8
        %s391 = scalar_lea.vmem [#allocation7], %s390
        // Predicated region
        $region61: #{tpu_custom_call.1} parent=51 // pred_check
          %p392 = pneg %p103
        $region62: #{tpu_custom_call.1} parent=51 // pred_check_branch
          %394 = sbr.rel (%p392) target = $region64
        $region63: #{tpu_custom_call.1} parent=51 // pred_region
          %395 = dma.done %s388, 128
        $region64: #{tpu_custom_call.1} parent=51 // pred_fallthru
          _
        // Predicated region
        $region65: #{tpu_custom_call.1} parent=51 // pred_check
          %p396 = pneg %p124
        $region66: #{tpu_custom_call.1} parent=51 // pred_check_branch
          %398 = sbr.rel (%p396) target = $region68
        $region67: #{tpu_custom_call.1} parent=51 // pred_region
          %399 = dma.done [#allocation9], 1024
        $region68: #{tpu_custom_call.1} parent=51 // pred_fallthru
          _
        // Predicated region
        $region69: #{tpu_custom_call.1} parent=51 // pred_check
          %p400 = pneg %p166
        $region70: #{tpu_custom_call.1} parent=51 // pred_check_branch
          %402 = sbr.rel (%p400) target = $region72
        $region71: #{tpu_custom_call.1} parent=51 // pred_region
          %403 = dma.done [#allocation9], 4096
        $region72: #{tpu_custom_call.1} parent=51 // pred_fallthru
          _
        // Predicated region
        $region73: #{tpu_custom_call.1} parent=51 // pred_check
          %p404 = pneg %p187
        $region74: #{tpu_custom_call.1} parent=51 // pred_check_branch
          %406 = sbr.rel (%p404) target = $region76
        $region75: #{tpu_custom_call.1} parent=51 // pred_region
          %407 = dma.done [#allocation12], 2048
        $region76: #{tpu_custom_call.1} parent=51 // pred_fallthru
          _
        // Predicated region
        $region77: #{tpu_custom_call.1} parent=51 // pred_check
          %p408 = pneg %p208
        $region78: #{tpu_custom_call.1} parent=51 // pred_check_branch
          %410 = sbr.rel (%p408) target = $region80
        $region79: #{tpu_custom_call.1} parent=51 // pred_region
          %411 = dma.done [#allocation12], 2048
        $region80: #{tpu_custom_call.1} parent=51 // pred_fallthru
          _
        %s412 = sand.u32 %s38, 1
        %s413 = scalar_lea.sflag [#allocation3], %s412
        %s414 = sand.u32 %s38, 1
        %s415 = smul.addr %s414, 8
        %s416 = scalar_lea.vmem [#allocation2], %s415
        %p417 = pneg %p51
        %p418 = pneg %p48
        %s419 = sand.u32 %s30, 1
        %s420 = scalar_lea.sflag [#allocation6], %s419
        %s421 = sand.u32 %s64, 1
        %s422 = smul.addr %s421, 8
        %s423 = scalar_lea.vmem [#allocation5], %s422
        %p424 = pneg %p77
        %p425 = pneg %p74
        %s426 = sand.u32 %s30, 1
        %s427 = scalar_lea.sflag [#allocation6], %s426
        %s428 = sand.u32 %s90, 1
        %s429 = smul.addr %s428, 8
        %s430 = scalar_lea.vmem [#allocation7], %s429
        %p431 = pneg %p103
        %p432 = pneg %p100
        %p433 = pneg %p124
        %p434 = pneg %p121
        %p435 = pneg %p145
        %p436 = pneg %p142
        %p437 = pneg %p166
        %p438 = pneg %p163
        %p439 = pneg %p187
        %p440 = pneg %p184
        %p441 = pneg %p208
        %p442 = pneg %p205
        %p443 = pneg %p234
        %p444 = pneg %p231
        %s445 = sand.u32 %s221, 1
        %s446 = scalar_lea.sflag [#allocation4], %s445
        %s447 = sand.u32 %s221, 1
        %s448 = smul.addr %s447, 8
        %s449 = scalar_lea.vmem [#allocation14], %s448
        %v450 = vld [vmem:[%s373] sm:$0xff]
        %v451 = vld [vmem:[%s382] sm:$0xff]
        %v452 = vld [vmem:[%s391] sm:$0xff]
        %v453 = vld [vmem:[#allocation8] sm:$0xff]
        %v454 = vld [vmem:[#allocation8 + $0x8] sm:$0xff]
        %v455 = vld [vmem:[#allocation8 + $0x10] sm:$0xff]
        %v456 = vld [vmem:[#allocation8 + $0x18] sm:$0xff]
        %v457 = vld [vmem:[#allocation8 + $0x20] sm:$0xff]
        %v458 = vld [vmem:[#allocation8 + $0x28] sm:$0xff]
        %v459 = vld [vmem:[#allocation8 + $0x30] sm:$0xff]
        %v460 = vld [vmem:[#allocation8 + $0x38] sm:$0xff]
        %v461 = vld [vmem:[%s4] sm:$0xf]
        %v463 = vlaneseq
        %v464 = vshrl.u32 %v463, 7
        %v465 = vsub.s32 0, %v464
        %v466 = vrot.slane %v461, %v465
        %v467 = vlaneseq
        %v468 = vshrl.u32 %v467, 7
        %v469 = vsub.s32 1, %v468
        %v470 = vrot.slane %v461, %v469
        %v471 = vlaneseq
        %v472 = vshrl.u32 %v471, 7
        %v473 = vsub.s32 2, %v472
        %v474 = vrot.slane %v461, %v473
        %v475 = vlaneseq
        %v476 = vshrl.u32 %v475, 7
        %v477 = vsub.s32 3, %v476
        %v478 = vrot.slane %v461, %v477
        %vm483 = vcmask 130048
        %v485 = vsel %vm483, %v450, 0
        %487 = vmatprep.subr.mxu0 %v454
        %488 = vmatpush1.msra.mxu0 %v453
        %489 = vmatprep.subr.mxu0 %v458
        %490 = vmatpush1.msra.mxu0 %v457
        %491 = vmatprep.subr.mxu0 0.0
        %492 = vmatpush1.msra.mxu0 0.0
        %493 = vmatprep.subr.mxu0 0.0
        %494 = vmatpush1.msra.mxu0 0.0
        %495 = vmatprep.subr.mxu0 0.0
        %496 = vmatpush1.msra.mxu0 0.0
        %497 = vmatprep.subr.mxu0 0.0
        %498 = vmatpush1.msra.mxu0 0.0
        %499 = vmatprep.subr.mxu0 0.0
        %500 = vmatpush1.msra.mxu0 0.0
        %501 = vmatprep.subr.mxu0 0.0
        %502 = vmatpush1.msra.mxu0 0.0
        %503 = vmatprep.subr.mxu0 0.0
        %504 = vmatpush1.msra.mxu0 0.0
        %505 = vmatprep.subr.mxu0 0.0
        %506 = vmatpush1.msra.mxu0 0.0
        %507 = vmatprep.subr.mxu0 0.0
        %508 = vmatpush1.msra.mxu0 0.0
        %509 = vmatprep.subr.mxu0 0.0
        %510 = vmatpush1.msra.mxu0 0.0
        %511 = vmatprep.subr.mxu0 0.0
        %512 = vmatpush1.msra.mxu0 0.0
        %513 = vmatprep.subr.mxu0 0.0
        %514 = vmatpush1.msra.mxu0 0.0
        %515 = vmatprep.subr.mxu0 0.0
        %516 = vmatpush1.msra.mxu0 0.0
        %517 = vmatprep.subr.mxu0 0.0
        %518 = vmatpush1.msra.mxu0 0.0
        %519 = vmatprep.subr.mxu0 0.0
        %520 = vmatpush1.msra.mxu0 0.0
        %521 = vmatprep.subr.mxu0 0.0
        %522 = vmatpush1.msra.mxu0 0.0
        %523 = vmatprep.subr.mxu0 0.0
        %524 = vmatpush1.msra.mxu0 0.0
        %525 = vmatprep.subr.mxu0 0.0
        %526 = vmatpush1.msra.mxu0 0.0
        %527 = vmatprep.subr.mxu0 0.0
        %528 = vmatpush1.msra.mxu0 0.0
        %529 = vmatprep.subr.mxu0 0.0
        %530 = vmatpush1.msra.mxu0 0.0
        %531 = vmatprep.subr.mxu0 0.0
        %532 = vmatpush1.msra.mxu0 0.0
        %533 = vmatprep.subr.mxu0 0.0
        %534 = vmatpush1.msra.mxu0 0.0
        %535 = vmatprep.subr.mxu0 0.0
        %536 = vmatpush1.msra.mxu0 0.0
        %537 = vmatprep.subr.mxu0 0.0
        %538 = vmatpush1.msra.mxu0 0.0
        %539 = vmatprep.subr.mxu0 0.0
        %540 = vmatpush1.msra.mxu0 0.0
        %541 = vmatprep.subr.mxu0 0.0
        %542 = vmatpush1.msra.mxu0 0.0
        %543 = vmatprep.subr.mxu0 0.0
        %544 = vmatpush1.msra.mxu0 0.0
        %545 = vmatprep.subr.mxu0 0.0
        %546 = vmatpush1.msra.mxu0 0.0
        %547 = vmatprep.subr.mxu0 0.0
        %548 = vmatpush1.msra.mxu0 0.0
        %549 = vmatprep.subr.mxu0 0.0
        %550 = vmatpush1.msra.mxu0 0.0
        %551 = vmatprep.mubr.f32.mxu0 0.0
        %552 = vmatmul.mubr.f32.gmra.mrb[0].mxu0 %v485
        %v553 = vpop.f32.mrb[0].mxu0
        %v554 = vadd.f32 %v466, %v553
        %v555 = vpop.f32.mrb[0].mxu0
        %v556 = vadd.f32 %v470, %v555
        %557 = vdwg.mxu0
        %558 = vmatprep.subr.mxu0 %v456
        %559 = vmatpush1.msra.mxu0 %v455
        %560 = vmatprep.subr.mxu0 %v460
        %561 = vmatpush1.msra.mxu0 %v459
        %562 = vmatprep.subr.mxu0 0.0
        %563 = vmatpush1.msra.mxu0 0.0
        %564 = vmatprep.subr.mxu0 0.0
        %565 = vmatpush1.msra.mxu0 0.0
        %566 = vmatprep.subr.mxu0 0.0
        %567 = vmatpush1.msra.mxu0 0.0
        %568 = vmatprep.subr.mxu0 0.0
        %569 = vmatpush1.msra.mxu0 0.0
        %570 = vmatprep.subr.mxu0 0.0
        %571 = vmatpush1.msra.mxu0 0.0
        %572 = vmatprep.subr.mxu0 0.0
        %573 = vmatpush1.msra.mxu0 0.0
        %574 = vmatprep.subr.mxu0 0.0
        %575 = vmatpush1.msra.mxu0 0.0
        %576 = vmatprep.subr.mxu0 0.0
        %577 = vmatpush1.msra.mxu0 0.0
        %578 = vmatprep.subr.mxu0 0.0
        %579 = vmatpush1.msra.mxu0 0.0
        %580 = vmatprep.subr.mxu0 0.0
        %581 = vmatpush1.msra.mxu0 0.0
        %582 = vmatprep.subr.mxu0 0.0
        %583 = vmatpush1.msra.mxu0 0.0
        %584 = vmatprep.subr.mxu0 0.0
        %585 = vmatpush1.msra.mxu0 0.0
        %586 = vmatprep.subr.mxu0 0.0
        %587 = vmatpush1.msra.mxu0 0.0
        %588 = vmatprep.subr.mxu0 0.0
        %589 = vmatpush1.msra.mxu0 0.0
        %590 = vmatprep.subr.mxu0 0.0
        %591 = vmatpush1.msra.mxu0 0.0
        %592 = vmatprep.subr.mxu0 0.0
        %593 = vmatpush1.msra.mxu0 0.0
        %594 = vmatprep.subr.mxu0 0.0
        %595 = vmatpush1.msra.mxu0 0.0
        %596 = vmatprep.subr.mxu0 0.0
        %597 = vmatpush1.msra.mxu0 0.0
        %598 = vmatprep.subr.mxu0 0.0
        %599 = vmatpush1.msra.mxu0 0.0
        %600 = vmatprep.subr.mxu0 0.0
        %601 = vmatpush1.msra.mxu0 0.0
        %602 = vmatprep.subr.mxu0 0.0
        %603 = vmatpush1.msra.mxu0 0.0
        %604 = vmatprep.subr.mxu0 0.0
        %605 = vmatpush1.msra.mxu0 0.0
        %606 = vmatprep.subr.mxu0 0.0
        %607 = vmatpush1.msra.mxu0 0.0
        %608 = vmatprep.subr.mxu0 0.0
        %609 = vmatpush1.msra.mxu0 0.0
        %610 = vmatprep.subr.mxu0 0.0
        %611 = vmatpush1.msra.mxu0 0.0
        %612 = vmatprep.subr.mxu0 0.0
        %613 = vmatpush1.msra.mxu0 0.0
        %614 = vmatprep.subr.mxu0 0.0
        %615 = vmatpush1.msra.mxu0 0.0
        %616 = vmatprep.subr.mxu0 0.0
        %617 = vmatpush1.msra.mxu0 0.0
        %618 = vmatprep.subr.mxu0 0.0
        %619 = vmatpush1.msra.mxu0 0.0
        %620 = vmatprep.subr.mxu0 0.0
        %621 = vmatpush1.msra.mxu0 0.0
        %622 = vmatprep.mubr.f32.mxu0 0.0
        %623 = vmatmul.mubr.f32.gmra.mrb[0].mxu0 %v485
        %v624 = vpop.f32.mrb[0].mxu0
        %v625 = vadd.f32 %v474, %v624
        %v626 = vpop.f32.mrb[0].mxu0
        %v627 = vadd.f32 %v478, %v626
        %628 = vdwg.mxu0
        %v629 = vld [vmem:[#allocation10] sm:$0xff]
        %v630 = vld [vmem:[#allocation10 + $0x8] sm:$0xff]
        %v631 = vld [vmem:[#allocation10 + $0x10] sm:$0xff]
        %v632 = vld [vmem:[#allocation10 + $0x18] sm:$0xff]
        %v633 = vld [vmem:[#allocation10 + $0x20] sm:$0xff]
        %v634 = vld [vmem:[#allocation10 + $0x28] sm:$0xff]
        %v635 = vld [vmem:[#allocation10 + $0x30] sm:$0xff]
        %v636 = vld [vmem:[#allocation10 + $0x38] sm:$0xff]
        %v637 = vld [vmem:[#allocation10 + $0x40] sm:$0xff]
        %v638 = vld [vmem:[#allocation10 + $0x48] sm:$0xff]
        %v639 = vld [vmem:[#allocation10 + $0x50] sm:$0xff]
        %v640 = vld [vmem:[#allocation10 + $0x58] sm:$0xff]
        %v641 = vld [vmem:[#allocation10 + $0x60] sm:$0xff]
        %v642 = vld [vmem:[#allocation10 + $0x68] sm:$0xff]
        %v643 = vld [vmem:[#allocation10 + $0x70] sm:$0xff]
        %v644 = vld [vmem:[#allocation10 + $0x78] sm:$0xff]
        %v645 = vld [vmem:[#allocation10 + $0x80] sm:$0xff]
        %v646 = vld [vmem:[#allocation10 + $0x88] sm:$0xff]
        %v647 = vld [vmem:[#allocation10 + $0x90] sm:$0xff]
        %v648 = vld [vmem:[#allocation10 + $0x98] sm:$0xff]
        %v649 = vld [vmem:[#allocation10 + $0xa0] sm:$0xff]
        %v650 = vld [vmem:[#allocation10 + $0xa8] sm:$0xff]
        %v651 = vld [vmem:[#allocation10 + $0xb0] sm:$0xff]
        %v652 = vld [vmem:[#allocation10 + $0xb8] sm:$0xff]
        %v653 = vld [vmem:[#allocation10 + $0xc0] sm:$0xff]
        %v654 = vld [vmem:[#allocation10 + $0xc8] sm:$0xff]
        %v655 = vld [vmem:[#allocation10 + $0xd0] sm:$0xff]
        %v656 = vld [vmem:[#allocation10 + $0xd8] sm:$0xff]
        %v657 = vld [vmem:[#allocation10 + $0xe0] sm:$0xff]
        %v658 = vld [vmem:[#allocation10 + $0xe8] sm:$0xff]
        %v659 = vld [vmem:[#allocation10 + $0xf0] sm:$0xff]
        %v660 = vld [vmem:[#allocation10 + $0xf8] sm:$0xff]
        %661 = vmatprep.subr.mxu0 %v630
        %662 = vmatpush1.msra.mxu0 %v629
        %663 = vmatprep.subr.mxu0 %v632
        %664 = vmatpush1.msra.mxu0 %v631
        %665 = vmatprep.subr.mxu0 %v634
        %666 = vmatpush1.msra.mxu0 %v633
        %667 = vmatprep.subr.mxu0 %v636
        %668 = vmatpush1.msra.mxu0 %v635
        %669 = vmatprep.subr.mxu0 %v638
        %670 = vmatpush1.msra.mxu0 %v637
        %671 = vmatprep.subr.mxu0 %v640
        %672 = vmatpush1.msra.mxu0 %v639
        %673 = vmatprep.subr.mxu0 %v642
        %674 = vmatpush1.msra.mxu0 %v641
        %675 = vmatprep.subr.mxu0 %v644
        %676 = vmatpush1.msra.mxu0 %v643
        %677 = vmatprep.subr.mxu0 %v646
        %678 = vmatpush1.msra.mxu0 %v645
        %679 = vmatprep.subr.mxu0 %v648
        %680 = vmatpush1.msra.mxu0 %v647
        %681 = vmatprep.subr.mxu0 %v650
        %682 = vmatpush1.msra.mxu0 %v649
        %683 = vmatprep.subr.mxu0 %v652
        %684 = vmatpush1.msra.mxu0 %v651
        %685 = vmatprep.subr.mxu0 %v654
        %686 = vmatpush1.msra.mxu0 %v653
        %687 = vmatprep.subr.mxu0 %v656
        %688 = vmatpush1.msra.mxu0 %v655
        %689 = vmatprep.subr.mxu0 %v658
        %690 = vmatpush1.msra.mxu0 %v657
        %691 = vmatprep.subr.mxu0 %v660
        %692 = vmatpush1.msra.mxu0 %v659
        %693 = vmatprep.subr.mxu0 0.0
        %694 = vmatpush1.msra.mxu0 0.0
        %695 = vmatprep.subr.mxu0 0.0
        %696 = vmatpush1.msra.mxu0 0.0
        %697 = vmatprep.subr.mxu0 0.0
        %698 = vmatpush1.msra.mxu0 0.0
        %699 = vmatprep.subr.mxu0 0.0
        %700 = vmatpush1.msra.mxu0 0.0
        %701 = vmatprep.subr.mxu0 0.0
        %702 = vmatpush1.msra.mxu0 0.0
        %703 = vmatprep.subr.mxu0 0.0
        %704 = vmatpush1.msra.mxu0 0.0
        %705 = vmatprep.subr.mxu0 0.0
        %706 = vmatpush1.msra.mxu0 0.0
        %707 = vmatprep.subr.mxu0 0.0
        %708 = vmatpush1.msra.mxu0 0.0
        %709 = vmatprep.subr.mxu0 0.0
        %710 = vmatpush1.msra.mxu0 0.0
        %711 = vmatprep.subr.mxu0 0.0
        %712 = vmatpush1.msra.mxu0 0.0
        %713 = vmatprep.subr.mxu0 0.0
        %714 = vmatpush1.msra.mxu0 0.0
        %715 = vmatprep.subr.mxu0 0.0
        %716 = vmatpush1.msra.mxu0 0.0
        %717 = vmatprep.subr.mxu0 0.0
        %718 = vmatpush1.msra.mxu0 0.0
        %719 = vmatprep.subr.mxu0 0.0
        %720 = vmatpush1.msra.mxu0 0.0
        %721 = vmatprep.subr.mxu0 0.0
        %722 = vmatpush1.msra.mxu0 0.0
        %723 = vmatprep.subr.mxu0 0.0
        %724 = vmatpush1.msra.mxu0 0.0
        %725 = vmatprep.mubr.f32.mxu0 0.0
        %726 = vmatmul.mubr.f32.gmra.mrb[0].mxu0 %v451
        %v727 = vpop.f32.mrb[0].mxu0
        %v728 = vadd.f32 0.0, %v727
        %v729 = vpop.f32.mrb[0].mxu0
        %v730 = vadd.f32 0.0, %v729
        %731 = vdwg.mxu0
        %v732 = vld [vmem:[#allocation11] sm:$0xff]
        %v733 = vld [vmem:[#allocation11 + $0x8] sm:$0xff]
        %v734 = vld [vmem:[#allocation11 + $0x10] sm:$0xff]
        %v735 = vld [vmem:[#allocation11 + $0x18] sm:$0xff]
        %v736 = vld [vmem:[#allocation11 + $0x20] sm:$0xff]
        %v737 = vld [vmem:[#allocation11 + $0x28] sm:$0xff]
        %v738 = vld [vmem:[#allocation11 + $0x30] sm:$0xff]
        %v739 = vld [vmem:[#allocation11 + $0x38] sm:$0xff]
        %v740 = vld [vmem:[#allocation11 + $0x40] sm:$0xff]
        %v741 = vld [vmem:[#allocation11 + $0x48] sm:$0xff]
        %v742 = vld [vmem:[#allocation11 + $0x50] sm:$0xff]
        %v743 = vld [vmem:[#allocation11 + $0x58] sm:$0xff]
        %v744 = vld [vmem:[#allocation11 + $0x60] sm:$0xff]
        %v745 = vld [vmem:[#allocation11 + $0x68] sm:$0xff]
        %v746 = vld [vmem:[#allocation11 + $0x70] sm:$0xff]
        %v747 = vld [vmem:[#allocation11 + $0x78] sm:$0xff]
        %748 = vmatprep.subr.mxu0 0.0
        %749 = vmatpush1.msra.mxu0 %v732
        %750 = vmatprep.subr.mxu0 0.0
        %751 = vmatpush1.msra.mxu0 %v733
        %752 = vmatprep.subr.mxu0 0.0
        %753 = vmatpush1.msra.mxu0 %v734
        %754 = vmatprep.subr.mxu0 0.0
        %755 = vmatpush1.msra.mxu0 %v735
        %756 = vmatprep.subr.mxu0 0.0
        %757 = vmatpush1.msra.mxu0 %v736
        %758 = vmatprep.subr.mxu0 0.0
        %759 = vmatpush1.msra.mxu0 %v737
        %760 = vmatprep.subr.mxu0 0.0
        %761 = vmatpush1.msra.mxu0 %v738
        %762 = vmatprep.subr.mxu0 0.0
        %763 = vmatpush1.msra.mxu0 %v739
        %764 = vmatprep.subr.mxu0 0.0
        %765 = vmatpush1.msra.mxu0 %v740
        %766 = vmatprep.subr.mxu0 0.0
        %767 = vmatpush1.msra.mxu0 %v741
        %768 = vmatprep.subr.mxu0 0.0
        %769 = vmatpush1.msra.mxu0 %v742
        %770 = vmatprep.subr.mxu0 0.0
        %771 = vmatpush1.msra.mxu0 %v743
        %772 = vmatprep.subr.mxu0 0.0
        %773 = vmatpush1.msra.mxu0 %v744
        %774 = vmatprep.subr.mxu0 0.0
        %775 = vmatpush1.msra.mxu0 %v745
        %776 = vmatprep.subr.mxu0 0.0
        %777 = vmatpush1.msra.mxu0 %v746
        %778 = vmatprep.subr.mxu0 0.0
        %779 = vmatpush1.msra.mxu0 %v747
        %780 = vmatprep.subr.mxu0 0.0
        %781 = vmatpush1.msra.mxu0 0.0
        %782 = vmatprep.subr.mxu0 0.0
        %783 = vmatpush1.msra.mxu0 0.0
        %784 = vmatprep.subr.mxu0 0.0
        %785 = vmatpush1.msra.mxu0 0.0
        %786 = vmatprep.subr.mxu0 0.0
        %787 = vmatpush1.msra.mxu0 0.0
        %788 = vmatprep.subr.mxu0 0.0
        %789 = vmatpush1.msra.mxu0 0.0
        %790 = vmatprep.subr.mxu0 0.0
        %791 = vmatpush1.msra.mxu0 0.0
        %792 = vmatprep.subr.mxu0 0.0
        %793 = vmatpush1.msra.mxu0 0.0
        %794 = vmatprep.subr.mxu0 0.0
        %795 = vmatpush1.msra.mxu0 0.0
        %796 = vmatprep.subr.mxu0 0.0
        %797 = vmatpush1.msra.mxu0 0.0
        %798 = vmatprep.subr.mxu0 0.0
        %799 = vmatpush1.msra.mxu0 0.0
        %800 = vmatprep.subr.mxu0 0.0
        %801 = vmatpush1.msra.mxu0 0.0
        %802 = vmatprep.subr.mxu0 0.0
        %803 = vmatpush1.msra.mxu0 0.0
        %804 = vmatprep.subr.mxu0 0.0
        %805 = vmatpush1.msra.mxu0 0.0
        %806 = vmatprep.subr.mxu0 0.0
        %807 = vmatpush1.msra.mxu0 0.0
        %808 = vmatprep.subr.mxu0 0.0
        %809 = vmatpush1.msra.mxu0 0.0
        %810 = vmatprep.subr.mxu0 0.0
        %811 = vmatpush1.msra.mxu0 0.0
        %812 = vmatprep.mubr.f32.mxu0 0.0
        %813 = vmatmul.mubr.f32.gmra.mrb[0].mxu0 %v452
        %v814 = vpop.f32.mrb[0].mxu0
        %v815 = vadd.f32 0.0, %v814
        %v816 = vpop.f32.mrb[0].mxu0
        %817 = vdwg.mxu0
        %v818 = vadd.f32 %v625, %v730
        %v819 = vtanh.pop %v818
        %v820 = vmul.f32 %v451, %v819
        %v821 = vld [vmem:[#allocation13] sm:$0xff]
        %v822 = vld [vmem:[#allocation13 + $0x8] sm:$0xff]
        %v823 = vld [vmem:[#allocation13 + $0x10] sm:$0xff]
        %v824 = vld [vmem:[#allocation13 + $0x18] sm:$0xff]
        %v825 = vld [vmem:[#allocation13 + $0x20] sm:$0xff]
        %v826 = vld [vmem:[#allocation13 + $0x28] sm:$0xff]
        %v827 = vld [vmem:[#allocation13 + $0x30] sm:$0xff]
        %v828 = vld [vmem:[#allocation13 + $0x38] sm:$0xff]
        %v829 = vld [vmem:[#allocation13 + $0x40] sm:$0xff]
        %v830 = vld [vmem:[#allocation13 + $0x48] sm:$0xff]
        %v831 = vld [vmem:[#allocation13 + $0x50] sm:$0xff]
        %v832 = vld [vmem:[#allocation13 + $0x58] sm:$0xff]
        %v833 = vld [vmem:[#allocation13 + $0x60] sm:$0xff]
        %v834 = vld [vmem:[#allocation13 + $0x68] sm:$0xff]
        %v835 = vld [vmem:[#allocation13 + $0x70] sm:$0xff]
        %v836 = vld [vmem:[#allocation13 + $0x78] sm:$0xff]
        %837 = vmatprep.subr.mxu0 0.0
        %838 = vmatpush1.msra.mxu0 %v821
        %839 = vmatprep.subr.mxu0 0.0
        %840 = vmatpush1.msra.mxu0 %v822
        %841 = vmatprep.subr.mxu0 0.0
        %842 = vmatpush1.msra.mxu0 %v823
        %843 = vmatprep.subr.mxu0 0.0
        %844 = vmatpush1.msra.mxu0 %v824
        %845 = vmatprep.subr.mxu0 0.0
        %846 = vmatpush1.msra.mxu0 %v825
        %847 = vmatprep.subr.mxu0 0.0
        %848 = vmatpush1.msra.mxu0 %v826
        %849 = vmatprep.subr.mxu0 0.0
        %850 = vmatpush1.msra.mxu0 %v827
        %851 = vmatprep.subr.mxu0 0.0
        %852 = vmatpush1.msra.mxu0 %v828
        %853 = vmatprep.subr.mxu0 0.0
        %854 = vmatpush1.msra.mxu0 %v829
        %855 = vmatprep.subr.mxu0 0.0
        %856 = vmatpush1.msra.mxu0 %v830
        %857 = vmatprep.subr.mxu0 0.0
        %858 = vmatpush1.msra.mxu0 %v831
        %859 = vmatprep.subr.mxu0 0.0
        %860 = vmatpush1.msra.mxu0 %v832
        %861 = vmatprep.subr.mxu0 0.0
        %862 = vmatpush1.msra.mxu0 %v833
        %863 = vmatprep.subr.mxu0 0.0
        %864 = vmatpush1.msra.mxu0 %v834
        %865 = vmatprep.subr.mxu0 0.0
        %866 = vmatpush1.msra.mxu0 %v835
        %867 = vmatprep.subr.mxu0 0.0
        %868 = vmatpush1.msra.mxu0 %v836
        %869 = vmatprep.subr.mxu0 0.0
        %870 = vmatpush1.msra.mxu0 0.0
        %871 = vmatprep.subr.mxu0 0.0
        %872 = vmatpush1.msra.mxu0 0.0
        %873 = vmatprep.subr.mxu0 0.0
        %874 = vmatpush1.msra.mxu0 0.0
        %875 = vmatprep.subr.mxu0 0.0
        %876 = vmatpush1.msra.mxu0 0.0
        %877 = vmatprep.subr.mxu0 0.0
        %878 = vmatpush1.msra.mxu0 0.0
        %879 = vmatprep.subr.mxu0 0.0
        %880 = vmatpush1.msra.mxu0 0.0
        %881 = vmatprep.subr.mxu0 0.0
        %882 = vmatpush1.msra.mxu0 0.0
        %883 = vmatprep.subr.mxu0 0.0
        %884 = vmatpush1.msra.mxu0 0.0
        %885 = vmatprep.subr.mxu0 0.0
        %886 = vmatpush1.msra.mxu0 0.0
        %887 = vmatprep.subr.mxu0 0.0
        %888 = vmatpush1.msra.mxu0 0.0
        %889 = vmatprep.subr.mxu0 0.0
        %890 = vmatpush1.msra.mxu0 0.0
        %891 = vmatprep.subr.mxu0 0.0
        %892 = vmatpush1.msra.mxu0 0.0
        %893 = vmatprep.subr.mxu0 0.0
        %894 = vmatpush1.msra.mxu0 0.0
        %895 = vmatprep.subr.mxu0 0.0
        %896 = vmatpush1.msra.mxu0 0.0
        %897 = vmatprep.subr.mxu0 0.0
        %898 = vmatpush1.msra.mxu0 0.0
        %899 = vmatprep.subr.mxu0 0.0
        %900 = vmatpush1.msra.mxu0 0.0
        %901 = vmatprep.mubr.f32.mxu0 0.0
        %902 = vmatmul.mubr.f32.gmra.mrb[0].mxu0 %v820
        %v903 = vpop.f32.mrb[0].mxu0
        %v904 = vadd.f32 0.0, %v903
        %v905 = vpop.f32.mrb[0].mxu0
        %906 = vdwg.mxu0
        %v907 = vadd.f32 %v554, %v728
        %v908 = vtanh.pop %v907
        %v909 = vadd.f32 %v556, %v815
        %v910 = vtanh.pop %v909
        %v911 = vadd.f32 %v627, %v904
        %v912 = vtanh.pop %v911
        %v913 = vsub.f32 1.0, %v910
        %v914 = vmul.f32 %v913, %v912
        %v915 = vmul.f32 %v908, %v451
        %v916 = vadd.f32 %v914, %v915
        %917 = vst [vmem:[%s449] sm:$0xff] %v916
        %s918 = sand.u32 %s221, 1
        %s919 = scalar_lea.sflag [#allocation4], %s918
        %s920 = sand.u32 %s221, 1
        %s921 = smul.addr %s920, 8
        %s922 = scalar_lea.vmem [#allocation14], %s921
        // Predicated region
        $region81: #{tpu_custom_call.1} parent=51 // pred_check
          %p923 = pneg %p231
        $region82: #{tpu_custom_call.1} parent=51 // pred_check_branch
          %925 = sbr.rel (%p923) target = $region84
        $region83: #{tpu_custom_call.1} parent=51 // pred_region
          %s927 = ssub.s32 128, 128
          %928 = vsyncadd %s919, %s927
          %s929 = smul.addr %s30, 128
          %s930 = scalar_lea.hbm %s8, %s929
          %s932 = sshll.u32 %s922, 4
          %s933 = int_to_ptr.vmem [resolvable:$true] %s932
          %935 = dma.vmem_to_hbm [thread:$0]  %s933, 128, %s930, %s919
        $region84: #{tpu_custom_call.1} parent=51 // pred_fallthru
          _
      $region52: #{tpu_custom_call.1} parent=5 // pred_fallthru
        _
      %p936 = scmp.le.s32.totalorder 2, %s25
      // Predicated region
      $region85: #{tpu_custom_call.1} parent=5 // pred_check
        %p937 = pneg %p936
      $region86: #{tpu_custom_call.1} parent=5 // pred_check_branch
        %939 = sbr.rel (%p937) target = $region88
      $region87: #{tpu_custom_call.1} parent=5 // pred_region
        %s940 = ssub.s32 %s25, 2
        // Predicated region
        $region89: #{tpu_custom_call.1} parent=87 // pred_check
          %p941 = pneg %p237
        $region90: #{tpu_custom_call.1} parent=87 // pred_check_branch
          %943 = sbr.rel (%p941) target = $region92
        $region91: #{tpu_custom_call.1} parent=87 // pred_region
          %s944 = sand.u32 %s222, 1
          %s945 = scalar_lea.sflag [#allocation4], %s944
          %s946 = sand.u32 %s222, 1
          %s947 = smul.addr %s946, 8
          %s948 = scalar_lea.vmem [#allocation14], %s947
          %949 = dma.done %s945, 128
        $region92: #{tpu_custom_call.1} parent=87 // pred_fallthru
          _
      $region88: #{tpu_custom_call.1} parent=5 // pred_fallthru
        _
    $region6: #{tpu_custom_call.1} parent=1 // loop_footer
      %s29 = sadd.s32 1, %s25
    $region7: #{tpu_custom_call.1} parent=1 // loop_footer_branch
      %24 = sbr.rel target = $region3
    $region8: #{tpu_custom_call.1} parent=1 // loop_exit
      _
    %950 = vsyncpa [#allocation3], 1
    %s951 = scalar_lea.sflag [#allocation3], 1
    %952 = vsyncpa %s951, 1
    %953 = vsyncpa [#allocation6], 1
    %s954 = scalar_lea.sflag [#allocation6], 1
    %955 = vsyncpa %s954, 1
    %956 = vsyncpa [#allocation9], 1
    %957 = vsyncpa [#allocation12], 1
    %958 = vsyncpa [#allocation4], 1
    %s959 = scalar_lea.sflag [#allocation4], 1
    %960 = vsyncpa %s959, 1

</llo_original>
